<compile_context>
chip_gen: v6e
topology: v6e:2x2x1
jax: 0.10.0
libtpu: 0.0.40
codegen_flags: <defaults>
</compile_context>

<pallas_src>
import jax
import jax.numpy as jnp
from jax.experimental import pallas as pl
from jax.experimental.pallas import tpu as pltpu


def _round_up(n: int, m: int) -> int:
    return ((n + m - 1) // m) * m


def munet_kernel(x_ref, w1_ref, b1_ref, w2t_ref, b2_ref, o_ref):
    x = x_ref[...]        # (3, TB)   batch on lanes
    w1 = w1_ref[...]      # (64, 3)
    b1 = b1_ref[...]      # (64, 1)
    w2t = w2t_ref[...]    # (64, 2)
    b2 = b2_ref[...]      # (2, 1)

    # fc1: K = 3 is far too small for the MXU -> three broadcast FMAs on the VPU.
    h = jnp.tanh(
        w1[:, 0:1] * x[0:1, :]
        + w1[:, 1:2] * x[1:2, :]
        + w1[:, 2:3] * x[2:3, :]
        + b1
    )                                                         # (64, TB), tanh on EUP

    # fc_mu: N = 2 -> two sublane dot-product reductions (XLU), no MXU push/pop.
    mu0 = jnp.sum(w2t[:, 0:1] * h, axis=0, keepdims=True)     # (1, TB)
    mu1 = jnp.sum(w2t[:, 1:2] * h, axis=0, keepdims=True)     # (1, TB)
    mu = jnp.concatenate([mu0, mu1], axis=0) + b2             # (2, TB)

    o_ref[...] = jnp.tanh(mu).astype(o_ref.dtype)             # lane-dense store


def munet_forward(x, w1, b1, w2, b2, *, batch_tile=1024):
    """MuNet forward.

    x : (B, 3) float32
    w1: (64, 3), b1: (64,)   -- fc1    (PyTorch (out, in) layout)
    w2: (2, 64), b2: (2,)    -- fc_mu
    returns mu: (B, 2) float32
    """
    B = x.shape[0]
    # Lane tile: multiple of 128, capped at `batch_tile`.  One (3,TB)+(2,TB) f32
    # tile at TB=1024 is ~20 KiB -> trivially fits VMEM (incl. v7x's 64 MiB).
    TB = min(batch_tile, _round_up(B, 128))
    B_pad = _round_up(B, TB)

    # Keep everything f32 (portable: v5e VPU/EUP have no bf16).
    x_t = jnp.zeros((3, B_pad), jnp.float32).at[:, :B].set(
        x.astype(jnp.float32).T)
    w1 = w1.astype(jnp.float32)                    # (64, 3)
    b1 = b1.astype(jnp.float32).reshape(64, 1)     # (64, 1)
    w2t = w2.astype(jnp.float32).T                 # (64, 2)  (pre-transposed: no in-kernel relayout)
    b2 = b2.astype(jnp.float32).reshape(2, 1)      # (2, 1)

    out_t = pl.pallas_call(
        munet_kernel,
        out_shape=jax.ShapeDtypeStruct((2, B_pad), jnp.float32),
        grid=(B_pad // TB,),
        in_specs=[
            pl.BlockSpec((3, TB), lambda i: (0, i)),   # x tiles streamed / pipelined
            pl.BlockSpec((64, 3), lambda i: (0, 0)),   # weights/biases stay resident
            pl.BlockSpec((64, 1), lambda i: (0, 0)),
            pl.BlockSpec((64, 2), lambda i: (0, 0)),
            pl.BlockSpec((2, 1), lambda i: (0, 0)),
        ],
        out_specs=pl.BlockSpec((2, TB), lambda i: (0, i)),
        compiler_params=pltpu.CompilerParams(
            dimension_semantics=("parallel",)),        # batch tiles are independent
    )(x_t, w1, b1, w2t, b2)

    return out_t[:, :B].T                              # back to (B, 2)


def init_params(key):
    """Deterministic init mirroring MuNet.__init__ + initialize() (PyTorch (out,in) layout)."""
    k1, k2, k3, k4 = jax.random.split(key, 4)
    lim1 = 1.0 / jnp.sqrt(3.0)   # nn.Linear(3, 64) default: U(-1/sqrt(in), 1/sqrt(in))
    w1 = jax.random.uniform(k1, (64, 3), jnp.float32, -lim1, lim1)
    b1 = jax.random.uniform(k2, (64,), jnp.float32, -lim1, lim1)
    # fc_mu: initialize(): U(-0.003, 0.003)
    w2 = jax.random.uniform(k3, (2, 64), jnp.float32, -0.003, 0.003)
    b2 = jax.random.uniform(k4, (2,), jnp.float32, -0.003, 0.003)
    return w1, b1, w2, b2


if __name__ == "__main__":
    key = jax.random.PRNGKey(0)
    kx, kp = jax.random.split(key)

    # NOTE: at B ~ 8 a pallas_call is dominated by fixed launch/grid overhead;
    # in a real DDPG loop, amortize by stacking many actors / env steps into
    # one batch before calling munet_forward (the kernel already supports it).
    B = 8
    x = jax.random.normal(kx, (B, 3), jnp.float32)
    w1, b1, w2, b2 = init_params(kp)

    mu = munet_forward(x, w1, b1, w2, b2)
    mu = jax.block_until_ready(mu)

    # Pure-JAX reference of the same math (PyTorch layout).
    ref = jnp.tanh(jnp.tanh(x @ w1.T + b1) @ w2.T + b2)
    assert mu.shape == (B, 2)
    assert jnp.allclose(mu, ref, atol=1e-5, rtol=1e-5), float(
        jnp.max(jnp.abs(mu - ref)))

    print("KERNEL_OK")
</pallas_src>

<mosaic_0001>
module attributes {stable_mosaic.version = 11 : i64} {
  func.func @munet_kernel(%arg0: i32, %arg1: memref<3x128xf32, #tpu.memory_space<vmem>>, %arg2: memref<64x3xf32, #tpu.memory_space<vmem>>, %arg3: memref<64x1xf32, #tpu.memory_space<vmem>>, %arg4: memref<64x2xf32, #tpu.memory_space<vmem>>, %arg5: memref<2x1xf32, #tpu.memory_space<vmem>>, %arg6: memref<2x128xf32, #tpu.memory_space<vmem>>) attributes {dimension_semantics = [#tpu.dimension_semantics<parallel>], iteration_bounds = array<i64: 1>, scalar_prefetch = 0 : i64, scratch_operands = 0 : i64, tpu.core_type = #tpu.core_type<tc>, window_params = [{transform_indices = @transform_0, window_bounds = array<i64: 3, 128>}, {pipeline_mode = #tpu.pipeline_mode<synchronous>, transform_indices = @transform_1, window_bounds = array<i64: 64, 3>}, {pipeline_mode = #tpu.pipeline_mode<synchronous>, transform_indices = @transform_2, window_bounds = array<i64: 64, 1>}, {pipeline_mode = #tpu.pipeline_mode<synchronous>, transform_indices = @transform_3, window_bounds = array<i64: 64, 2>}, {pipeline_mode = #tpu.pipeline_mode<synchronous>, transform_indices = @transform_4, window_bounds = array<i64: 2, 1>}, {transform_indices = @transform_5, window_bounds = array<i64: 2, 128>}]} {
    %c0 = arith.constant 0 : index
    %c0_0 = arith.constant 0 : index
    %0 = vector.load %arg1[%c0, %c0_0] : memref<3x128xf32, #tpu.memory_space<vmem>>, vector<3x128xf32>
    %c0_1 = arith.constant 0 : index
    %c0_2 = arith.constant 0 : index
    %1 = vector.load %arg2[%c0_1, %c0_2] : memref<64x3xf32, #tpu.memory_space<vmem>>, vector<64x3xf32>
    %c0_3 = arith.constant 0 : index
    %c0_4 = arith.constant 0 : index
    %2 = vector.load %arg3[%c0_3, %c0_4] : memref<64x1xf32, #tpu.memory_space<vmem>>, vector<64x1xf32>
    %c0_5 = arith.constant 0 : index
    %c0_6 = arith.constant 0 : index
    %3 = vector.load %arg4[%c0_5, %c0_6] : memref<64x2xf32, #tpu.memory_space<vmem>>, vector<64x2xf32>
    %c0_7 = arith.constant 0 : index
    %c0_8 = arith.constant 0 : index
    %4 = vector.load %arg5[%c0_7, %c0_8] : memref<2x1xf32, #tpu.memory_space<vmem>>, vector<2x1xf32>
    %5 = vector.extract_strided_slice %1 {offsets = [0, 0], sizes = [64, 1], strides = [1, 1]} : vector<64x3xf32> to vector<64x1xf32>
    %6 = vector.extract_strided_slice %0 {offsets = [0, 0], sizes = [1, 128], strides = [1, 1]} : vector<3x128xf32> to vector<1x128xf32>
    %7 = vector.broadcast %5 : vector<64x1xf32> to vector<64x128xf32>
    %8 = vector.broadcast %6 : vector<1x128xf32> to vector<64x128xf32>
    %9 = arith.mulf %7, %8 : vector<64x128xf32>
    %10 = vector.extract_strided_slice %1 {offsets = [0, 1], sizes = [64, 1], strides = [1, 1]} : vector<64x3xf32> to vector<64x1xf32>
    %11 = vector.extract_strided_slice %0 {offsets = [1, 0], sizes = [1, 128], strides = [1, 1]} : vector<3x128xf32> to vector<1x128xf32>
    %12 = vector.broadcast %10 : vector<64x1xf32> to vector<64x128xf32>
    %13 = vector.broadcast %11 : vector<1x128xf32> to vector<64x128xf32>
    %14 = arith.mulf %12, %13 : vector<64x128xf32>
    %15 = arith.addf %9, %14 : vector<64x128xf32>
    %16 = vector.extract_strided_slice %1 {offsets = [0, 2], sizes = [64, 1], strides = [1, 1]} : vector<64x3xf32> to vector<64x1xf32>
    %17 = vector.extract_strided_slice %0 {offsets = [2, 0], sizes = [1, 128], strides = [1, 1]} : vector<3x128xf32> to vector<1x128xf32>
    %18 = vector.broadcast %16 : vector<64x1xf32> to vector<64x128xf32>
    %19 = vector.broadcast %17 : vector<1x128xf32> to vector<64x128xf32>
    %20 = arith.mulf %18, %19 : vector<64x128xf32>
    %21 = arith.addf %15, %20 : vector<64x128xf32>
    %22 = vector.broadcast %2 : vector<64x1xf32> to vector<64x128xf32>
    %23 = arith.addf %21, %22 : vector<64x128xf32>
    %24 = math.tanh %23 : vector<64x128xf32>
    %25 = vector.extract_strided_slice %3 {offsets = [0, 0], sizes = [64, 1], strides = [1, 1]} : vector<64x2xf32> to vector<64x1xf32>
    %26 = vector.broadcast %25 : vector<64x1xf32> to vector<64x128xf32>
    %27 = arith.mulf %26, %24 : vector<64x128xf32>
    %cst = arith.constant dense<0.000000e+00> : vector<128xf32>
    %28 = vector.multi_reduction <add>, %27, %cst [0] : vector<64x128xf32> to vector<128xf32>
    %29 = vector.shape_cast %28 : vector<128xf32> to vector<1x128xf32>
    %30 = vector.extract_strided_slice %3 {offsets = [0, 1], sizes = [64, 1], strides = [1, 1]} : vector<64x2xf32> to vector<64x1xf32>
    %31 = vector.broadcast %30 : vector<64x1xf32> to vector<64x128xf32>
    %32 = arith.mulf %31, %24 : vector<64x128xf32>
    %cst_9 = arith.constant dense<0.000000e+00> : vector<128xf32>
    %33 = vector.multi_reduction <add>, %32, %cst_9 [0] : vector<64x128xf32> to vector<128xf32>
    %34 = vector.shape_cast %33 : vector<128xf32> to vector<1x128xf32>
    %35 = tpu.concatenate %29, %34 in 0 : vector<1x128xf32>, vector<1x128xf32> -> vector<2x128xf32>
    %36 = vector.broadcast %4 : vector<2x1xf32> to vector<2x128xf32>
    %37 = arith.addf %35, %36 : vector<2x128xf32>
    %38 = math.tanh %37 : vector<2x128xf32>
    %c0_10 = arith.constant 0 : index
    %c0_11 = arith.constant 0 : index
    %39 = vector.load %arg6[%c0_10, %c0_11] : memref<2x128xf32, #tpu.memory_space<vmem>>, vector<2x128xf32>
    tpu.vector_store %arg6[%c0_10, %c0_11], %38 {strides = array<i32>} : memref<2x128xf32, #tpu.memory_space<vmem>>, vector<2x128xf32>,
    return
  }
  func.func @transform_0(%arg0: i32) -> (i32, i32) {
    %c0_i32 = arith.constant 0 : i32
    %c0_i32_0 = arith.constant 0 : i32
    return %c0_i32, %arg0 : i32, i32
  }
  func.func @transform_1(%arg0: i32) -> (i32, i32) {
    %c0_i32 = arith.constant 0 : i32
    %c0_i32_0 = arith.constant 0 : i32
    %c0_i32_1 = arith.constant 0 : i32
    return %c0_i32, %c0_i32_0 : i32, i32
  }
  func.func @transform_2(%arg0: i32) -> (i32, i32) {
    %c0_i32 = arith.constant 0 : i32
    %c0_i32_0 = arith.constant 0 : i32
    %c0_i32_1 = arith.constant 0 : i32
    return %c0_i32, %c0_i32_0 : i32, i32
  }
  func.func @transform_3(%arg0: i32) -> (i32, i32) {
    %c0_i32 = arith.constant 0 : i32
    %c0_i32_0 = arith.constant 0 : i32
    %c0_i32_1 = arith.constant 0 : i32
    return %c0_i32, %c0_i32_0 : i32, i32
  }
  func.func @transform_4(%arg0: i32) -> (i32, i32) {
    %c0_i32 = arith.constant 0 : i32
    %c0_i32_0 = arith.constant 0 : i32
    %c0_i32_1 = arith.constant 0 : i32
    return %c0_i32, %c0_i32_0 : i32, i32
  }
  func.func @transform_5(%arg0: i32) -> (i32, i32) {
    %c0_i32 = arith.constant 0 : i32
    %c0_i32_0 = arith.constant 0 : i32
    return %c0_i32, %arg0 : i32, i32
  }
}

</mosaic_0001>

<llo_original>
// kernel: tpu_custom_call.1
$region0: #{tpu_custom_call.1}
  #allocation0 [shape = 'u32[]', space=smem, size = 0x4, offset = 0x4, fixed_abs, tag = 'smem constant byte address 0x4 - core index']
  #allocation1 [shape = 'u32[144,128]{1,0:T(1,128)}', space=vmem, size = 0x12000, scoped, tag = 'internal scratch']
  %s0 = inlined_call_operand.vmem [shape: f32[3,128], index: 0, kind: input, shape index: {}]
  %s1 = inlined_call_operand.vmem [shape: f32[64,3], index: 1, kind: input, shape index: {}]
  %s2 = inlined_call_operand.vmem [shape: f32[64,1], index: 2, kind: input, shape index: {}]
  %s3 = inlined_call_operand.vmem [shape: f32[64,2], index: 3, kind: input, shape index: {}]
  %s4 = inlined_call_operand.vmem [shape: f32[2,1], index: 4, kind: input, shape index: {}]
  %s5 = inlined_call_operand.hbm [shape: f32[2,128], index: 5, kind: output, shape index: {}]
  %s6 = sld [smem:[#allocation0]]
  $region30: #{tpu_custom_call.1} parent=0
    _
  %s8 = ssub.s32 1, %s6
  %s9 = scalar_select 0, %s8, %s6
  $region1: #{tpu_custom_call.1} parent=0
    #allocation2 [shape = 'u8[1024]{0}', space=vmem, size = 0x400, scoped, tag = 'output window, operand 0, single buffered']
    #allocation3 [shape = 's32[1]{0}', space=sflag, size = 0x4, scoped, tag = 'scoped memory for tpu_custom_call.1']
    %10 = vsyncpa [#allocation3], 0
    // Predicated region
    $region2: #{tpu_custom_call.1} parent=1 // pred_check
      _
    $region3: #{tpu_custom_call.1} parent=1 // pred_check_branch
      %12 = sbr.rel (0) target = $region5
    $region4: #{tpu_custom_call.1} parent=1 // pred_region
      _
    $region5: #{tpu_custom_call.1} parent=1 // pred_fallthru
      _
    // Predicated region
    $region6: #{tpu_custom_call.1} parent=1 // pred_check
      _
    $region7: #{tpu_custom_call.1} parent=1 // pred_check_branch
      %14 = sbr.rel (0) target = $region9
    $region8: #{tpu_custom_call.1} parent=1 // pred_region
      _
    $region9: #{tpu_custom_call.1} parent=1 // pred_fallthru
      _
    // Predicated region
    $region10: #{tpu_custom_call.1} parent=1 // pred_check
      _
    $region11: #{tpu_custom_call.1} parent=1 // pred_check_branch
      %16 = sbr.rel (0) target = $region13
    $region12: #{tpu_custom_call.1} parent=1 // pred_region
      _
    $region13: #{tpu_custom_call.1} parent=1 // pred_fallthru
      _
    // Predicated region
    $region14: #{tpu_custom_call.1} parent=1 // pred_check
      _
    $region15: #{tpu_custom_call.1} parent=1 // pred_check_branch
      %18 = sbr.rel (0) target = $region17
    $region16: #{tpu_custom_call.1} parent=1 // pred_region
      _
    $region17: #{tpu_custom_call.1} parent=1 // pred_fallthru
      _
    // Predicated region
    $region18: #{tpu_custom_call.1} parent=1 // pred_check
      _
    $region19: #{tpu_custom_call.1} parent=1 // pred_check_branch
      %20 = sbr.rel (0) target = $region21
    $region20: #{tpu_custom_call.1} parent=1 // pred_region
      _
    $region21: #{tpu_custom_call.1} parent=1 // pred_fallthru
      _
    %v21 = vld [vmem:[%s0] sm:$0x7]
    %v22 = vld [vmem:[%s1] sm:$0xff]
    %v23 = vld [vmem:[%s1 + $0x8] sm:$0xff]
    %v24 = vld [vmem:[%s1 + $0x10] sm:$0xff]
    %v25 = vld [vmem:[%s1 + $0x18] sm:$0xff]
    %v26 = vld [vmem:[%s1 + $0x20] sm:$0xff]
    %v27 = vld [vmem:[%s1 + $0x28] sm:$0xff]
    %v28 = vld [vmem:[%s1 + $0x30] sm:$0xff]
    %v29 = vld [vmem:[%s1 + $0x38] sm:$0xff]
    %v30 = vld [vmem:[%s2] sm:$0xff]
    %v31 = vld [vmem:[%s2 + $0x8] sm:$0xff]
    %v32 = vld [vmem:[%s2 + $0x10] sm:$0xff]
    %v33 = vld [vmem:[%s2 + $0x18] sm:$0xff]
    %v34 = vld [vmem:[%s2 + $0x20] sm:$0xff]
    %v35 = vld [vmem:[%s2 + $0x28] sm:$0xff]
    %v36 = vld [vmem:[%s2 + $0x30] sm:$0xff]
    %v37 = vld [vmem:[%s2 + $0x38] sm:$0xff]
    %v38 = vld [vmem:[%s3] sm:$0xff]
    %v39 = vld [vmem:[%s3 + $0x8] sm:$0xff]
    %v40 = vld [vmem:[%s3 + $0x10] sm:$0xff]
    %v41 = vld [vmem:[%s3 + $0x18] sm:$0xff]
    %v42 = vld [vmem:[%s3 + $0x20] sm:$0xff]
    %v43 = vld [vmem:[%s3 + $0x28] sm:$0xff]
    %v44 = vld [vmem:[%s3 + $0x30] sm:$0xff]
    %v45 = vld [vmem:[%s3 + $0x38] sm:$0xff]
    %v46 = vld [vmem:[%s4] sm:$0x3]
    %48 = vset.pattern.permute.xlu0 0
    %49 = vperm.xlu0 %48, %v22
    %v50 = vpop.permute.xlu0 %49
    %53 = vset.pattern.permute.xlu0 0
    %54 = vperm.xlu0 %53, %v23
    %v55 = vpop.permute.xlu0 %54
    %58 = vset.pattern.permute.xlu0 0
    %59 = vperm.xlu0 %58, %v24
    %v60 = vpop.permute.xlu0 %59
    %63 = vset.pattern.permute.xlu0 0
    %64 = vperm.xlu0 %63, %v25
    %v65 = vpop.permute.xlu0 %64
    %68 = vset.pattern.permute.xlu0 0
    %69 = vperm.xlu0 %68, %v26
    %v70 = vpop.permute.xlu0 %69
    %73 = vset.pattern.permute.xlu0 0
    %74 = vperm.xlu0 %73, %v27
    %v75 = vpop.permute.xlu0 %74
    %78 = vset.pattern.permute.xlu0 0
    %79 = vperm.xlu0 %78, %v28
    %v80 = vpop.permute.xlu0 %79
    %83 = vset.pattern.permute.xlu0 0
    %84 = vperm.xlu0 %83, %v29
    %v85 = vpop.permute.xlu0 %84
    %v87 = vlaneseq
    %v88 = vshrl.u32 %v87, 7
    %v89 = vsub.s32 0, %v88
    %v90 = vrot.slane %v21, %v89
    %v91 = vmul.f32 %v50, %v90
    %v92 = vmul.f32 %v55, %v90
    %v93 = vmul.f32 %v60, %v90
    %v94 = vmul.f32 %v65, %v90
    %v95 = vmul.f32 %v70, %v90
    %v96 = vmul.f32 %v75, %v90
    %v97 = vmul.f32 %v80, %v90
    %v98 = vmul.f32 %v85, %v90
    %99 = vset.pattern.permute.xlu0 1
    %100 = vperm.xlu0 %99, %v22
    %v101 = vpop.permute.xlu0 %100
    %103 = vset.pattern.permute.xlu0 1
    %104 = vperm.xlu0 %103, %v23
    %v105 = vpop.permute.xlu0 %104
    %107 = vset.pattern.permute.xlu0 1
    %108 = vperm.xlu0 %107, %v24
    %v109 = vpop.permute.xlu0 %108
    %111 = vset.pattern.permute.xlu0 1
    %112 = vperm.xlu0 %111, %v25
    %v113 = vpop.permute.xlu0 %112
    %115 = vset.pattern.permute.xlu0 1
    %116 = vperm.xlu0 %115, %v26
    %v117 = vpop.permute.xlu0 %116
    %119 = vset.pattern.permute.xlu0 1
    %120 = vperm.xlu0 %119, %v27
    %v121 = vpop.permute.xlu0 %120
    %123 = vset.pattern.permute.xlu0 1
    %124 = vperm.xlu0 %123, %v28
    %v125 = vpop.permute.xlu0 %124
    %127 = vset.pattern.permute.xlu0 1
    %128 = vperm.xlu0 %127, %v29
    %v129 = vpop.permute.xlu0 %128
    %v131 = vlaneseq
    %v132 = vshrl.u32 %v131, 7
    %v133 = vsub.s32 1, %v132
    %v134 = vrot.slane %v21, %v133
    %v135 = vmul.f32 %v101, %v134
    %v136 = vmul.f32 %v105, %v134
    %v137 = vmul.f32 %v109, %v134
    %v138 = vmul.f32 %v113, %v134
    %v139 = vmul.f32 %v117, %v134
    %v140 = vmul.f32 %v121, %v134
    %v141 = vmul.f32 %v125, %v134
    %v142 = vmul.f32 %v129, %v134
    %v143 = vadd.f32 %v91, %v135
    %v144 = vadd.f32 %v92, %v136
    %v145 = vadd.f32 %v93, %v137
    %v146 = vadd.f32 %v94, %v138
    %v147 = vadd.f32 %v95, %v139
    %v148 = vadd.f32 %v96, %v140
    %v149 = vadd.f32 %v97, %v141
    %v150 = vadd.f32 %v98, %v142
    %151 = vset.pattern.permute.xlu0 2
    %152 = vperm.xlu0 %151, %v22
    %v153 = vpop.permute.xlu0 %152
    %155 = vset.pattern.permute.xlu0 2
    %156 = vperm.xlu0 %155, %v23
    %v157 = vpop.permute.xlu0 %156
    %159 = vset.pattern.permute.xlu0 2
    %160 = vperm.xlu0 %159, %v24
    %v161 = vpop.permute.xlu0 %160
    %163 = vset.pattern.permute.xlu0 2
    %164 = vperm.xlu0 %163, %v25
    %v165 = vpop.permute.xlu0 %164
    %167 = vset.pattern.permute.xlu0 2
    %168 = vperm.xlu0 %167, %v26
    %v169 = vpop.permute.xlu0 %168
    %171 = vset.pattern.permute.xlu0 2
    %172 = vperm.xlu0 %171, %v27
    %v173 = vpop.permute.xlu0 %172
    %175 = vset.pattern.permute.xlu0 2
    %176 = vperm.xlu0 %175, %v28
    %v177 = vpop.permute.xlu0 %176
    %179 = vset.pattern.permute.xlu0 2
    %180 = vperm.xlu0 %179, %v29
    %v181 = vpop.permute.xlu0 %180
    %v183 = vlaneseq
    %v184 = vshrl.u32 %v183, 7
    %v185 = vsub.s32 2, %v184
    %v186 = vrot.slane %v21, %v185
    %v187 = vmul.f32 %v153, %v186
    %v188 = vmul.f32 %v157, %v186
    %v189 = vmul.f32 %v161, %v186
    %v190 = vmul.f32 %v165, %v186
    %v191 = vmul.f32 %v169, %v186
    %v192 = vmul.f32 %v173, %v186
    %v193 = vmul.f32 %v177, %v186
    %v194 = vmul.f32 %v181, %v186
    %v195 = vadd.f32 %v143, %v187
    %v196 = vadd.f32 %v144, %v188
    %v197 = vadd.f32 %v145, %v189
    %v198 = vadd.f32 %v146, %v190
    %v199 = vadd.f32 %v147, %v191
    %v200 = vadd.f32 %v148, %v192
    %v201 = vadd.f32 %v149, %v193
    %v202 = vadd.f32 %v150, %v194
    %204 = vset.pattern.permute.xlu0 0
    %205 = vperm.xlu0 %204, %v30
    %v206 = vpop.permute.xlu0 %205
    %209 = vset.pattern.permute.xlu0 0
    %210 = vperm.xlu0 %209, %v31
    %v211 = vpop.permute.xlu0 %210
    %214 = vset.pattern.permute.xlu0 0
    %215 = vperm.xlu0 %214, %v32
    %v216 = vpop.permute.xlu0 %215
    %219 = vset.pattern.permute.xlu0 0
    %220 = vperm.xlu0 %219, %v33
    %v221 = vpop.permute.xlu0 %220
    %224 = vset.pattern.permute.xlu0 0
    %225 = vperm.xlu0 %224, %v34
    %v226 = vpop.permute.xlu0 %225
    %229 = vset.pattern.permute.xlu0 0
    %230 = vperm.xlu0 %229, %v35
    %v231 = vpop.permute.xlu0 %230
    %234 = vset.pattern.permute.xlu0 0
    %235 = vperm.xlu0 %234, %v36
    %v236 = vpop.permute.xlu0 %235
    %239 = vset.pattern.permute.xlu0 0
    %240 = vperm.xlu0 %239, %v37
    %v241 = vpop.permute.xlu0 %240
    %v243 = vadd.f32 %v195, %v206
    %v244 = vadd.f32 %v196, %v211
    %v245 = vadd.f32 %v197, %v216
    %v246 = vadd.f32 %v198, %v221
    %v247 = vadd.f32 %v199, %v226
    %v248 = vadd.f32 %v200, %v231
    %v249 = vadd.f32 %v201, %v236
    %v250 = vadd.f32 %v202, %v241
    %v251 = vtanh.pop %v243
    %v252 = vtanh.pop %v244
    %v253 = vtanh.pop %v245
    %v254 = vtanh.pop %v246
    %v255 = vtanh.pop %v247
    %v256 = vtanh.pop %v248
    %v257 = vtanh.pop %v249
    %v258 = vtanh.pop %v250
    %260 = vset.pattern.permute.xlu0 0
    %261 = vperm.xlu0 %260, %v38
    %v262 = vpop.permute.xlu0 %261
    %265 = vset.pattern.permute.xlu0 0
    %266 = vperm.xlu0 %265, %v39
    %v267 = vpop.permute.xlu0 %266
    %270 = vset.pattern.permute.xlu0 0
    %271 = vperm.xlu0 %270, %v40
    %v272 = vpop.permute.xlu0 %271
    %275 = vset.pattern.permute.xlu0 0
    %276 = vperm.xlu0 %275, %v41
    %v277 = vpop.permute.xlu0 %276
    %280 = vset.pattern.permute.xlu0 0
    %281 = vperm.xlu0 %280, %v42
    %v282 = vpop.permute.xlu0 %281
    %285 = vset.pattern.permute.xlu0 0
    %286 = vperm.xlu0 %285, %v43
    %v287 = vpop.permute.xlu0 %286
    %290 = vset.pattern.permute.xlu0 0
    %291 = vperm.xlu0 %290, %v44
    %v292 = vpop.permute.xlu0 %291
    %295 = vset.pattern.permute.xlu0 0
    %296 = vperm.xlu0 %295, %v45
    %v297 = vpop.permute.xlu0 %296
    %v299 = vmul.f32 %v262, %v251
    %v300 = vmul.f32 %v267, %v252
    %v301 = vmul.f32 %v272, %v253
    %v302 = vmul.f32 %v277, %v254
    %v303 = vmul.f32 %v282, %v255
    %v304 = vmul.f32 %v287, %v256
    %v305 = vmul.f32 %v292, %v257
    %v306 = vmul.f32 %v297, %v258
    %v307 = vadd.f32 %v299, %v300
    %v308 = vadd.f32 %v307, %v301
    %v309 = vadd.f32 %v308, %v302
    %v310 = vadd.f32 %v309, %v303
    %v311 = vadd.f32 %v310, %v304
    %v312 = vadd.f32 %v311, %v305
    %v313 = vadd.f32 %v312, %v306
    %v314 = vrot.slane %v313, 4
    %v315 = vadd.f32 %v313, %v314
    %v316 = vrot.slane %v315, 2
    %v317 = vadd.f32 %v315, %v316
    %v318 = vrot.slane %v317, 1
    %v319 = vadd.f32 %v317, %v318
    %320 = vset.pattern.permute.xlu0 1
    %321 = vperm.xlu0 %320, %v38
    %v322 = vpop.permute.xlu0 %321
    %324 = vset.pattern.permute.xlu0 1
    %325 = vperm.xlu0 %324, %v39
    %v326 = vpop.permute.xlu0 %325
    %328 = vset.pattern.permute.xlu0 1
    %329 = vperm.xlu0 %328, %v40
    %v330 = vpop.permute.xlu0 %329
    %332 = vset.pattern.permute.xlu0 1
    %333 = vperm.xlu0 %332, %v41
    %v334 = vpop.permute.xlu0 %333
    %336 = vset.pattern.permute.xlu0 1
    %337 = vperm.xlu0 %336, %v42
    %v338 = vpop.permute.xlu0 %337
    %340 = vset.pattern.permute.xlu0 1
    %341 = vperm.xlu0 %340, %v43
    %v342 = vpop.permute.xlu0 %341
    %344 = vset.pattern.permute.xlu0 1
    %345 = vperm.xlu0 %344, %v44
    %v346 = vpop.permute.xlu0 %345
    %348 = vset.pattern.permute.xlu0 1
    %349 = vperm.xlu0 %348, %v45
    %v350 = vpop.permute.xlu0 %349
    %v352 = vmul.f32 %v322, %v251
    %v353 = vmul.f32 %v326, %v252
    %v354 = vmul.f32 %v330, %v253
    %v355 = vmul.f32 %v334, %v254
    %v356 = vmul.f32 %v338, %v255
    %v357 = vmul.f32 %v342, %v256
    %v358 = vmul.f32 %v346, %v257
    %v359 = vmul.f32 %v350, %v258
    %v360 = vadd.f32 %v352, %v353
    %v361 = vadd.f32 %v360, %v354
    %v362 = vadd.f32 %v361, %v355
    %v363 = vadd.f32 %v362, %v356
    %v364 = vadd.f32 %v363, %v357
    %v365 = vadd.f32 %v364, %v358
    %v366 = vadd.f32 %v365, %v359
    %v367 = vrot.slane %v366, 4
    %v368 = vadd.f32 %v366, %v367
    %v369 = vrot.slane %v368, 2
    %v370 = vadd.f32 %v368, %v369
    %v371 = vrot.slane %v370, 1
    %v372 = vadd.f32 %v370, %v371
    %vm373 = vcmask 1040384
    %v374 = vsel %vm373, %v319, %v372
    %376 = vset.pattern.permute.xlu0 0
    %377 = vperm.xlu0 %376, %v46
    %v378 = vpop.permute.xlu0 %377
    %v380 = vadd.f32 %v374, %v378
    %v381 = vtanh.pop %v380
    %382 = vst [vmem:[#allocation2] sm:$0x3] %v381
    // Predicated region
    $region22: #{tpu_custom_call.1} parent=1 // pred_check
      _
    $region23: #{tpu_custom_call.1} parent=1 // pred_check_branch
      %384 = sbr.rel (0) target = $region25
    $region24: #{tpu_custom_call.1} parent=1 // pred_region
      %s386 = ssub.s32 32, 32
      %387 = vsyncadd [#allocation3], %s386
      %s389 = sshll.u32 [#allocation2], 4
      %s390 = int_to_ptr.vmem [resolvable:$true] %s389
      %392 = dma.vmem_to_hbm [thread:$0]  %s390, 32, %s5, [#allocation3]
    $region25: #{tpu_custom_call.1} parent=1 // pred_fallthru
      _
    // Predicated region
    $region26: #{tpu_custom_call.1} parent=1 // pred_check
      _
    $region27: #{tpu_custom_call.1} parent=1 // pred_check_branch
      %394 = sbr.rel (0) target = $region29
    $region28: #{tpu_custom_call.1} parent=1 // pred_region
      %395 = dma.done [#allocation3], 32
    $region29: #{tpu_custom_call.1} parent=1 // pred_fallthru
      _
    %396 = vsyncpa [#allocation3], 1

</llo_original>
